<compile_context>
chip_gen: v6e
topology: v6e:2x2x1
jax: 0.10.0
libtpu: 0.0.40
codegen_flags: <defaults>
</compile_context>

<pallas_src>
import functools
import math

import numpy as np

import jax
import jax.numpy as jnp
from jax.experimental import pallas as pl
from jax.experimental.pallas import tpu as pltpu


_NEG_LARGE = -1e30  # finite mask value: no exp(-inf) NaN hazard


def _default_vmem_limit():
    """Derive a VMEM budget from the chip (v7x: 64 MiB; v5e/v6e: 128 MiB)."""
    try:
        cap = int(pltpu.get_tpu_info().vmem_capacity_bytes)
        return min(3 * cap // 4, 96 * 1024 * 1024)
    except Exception:  # interpret mode / CPU / API unavailable
        return 48 * 1024 * 1024


def _pick_tile(n, pref):
    """Largest power-of-two tile (multiple of 8) <= pref that divides n, else n."""
    for t in (pref, 512, 256, 128, 64, 32, 16, 8):
        if t <= pref and t <= n and n % t == 0:
            return t
    return n  # full dim (always legal for a BlockSpec), avoids odd divisors


# --------------------------- Kernel 1: fused QKV projection ---------------------------
def _qkv_proj_kernel(x_ref, wqkv_ref, q_ref, k_ref, v_ref, *,
                     num_heads, head_dim, precision):
    # x_ref: (1, tr, d_in); wqkv_ref: (d_in, 3*d_out) with Q columns pre-scaled.
    # q/k/v_ref: (1, H, tr, head_dim) head-major outputs.
    x = x_ref[0]
    qkv = jnp.dot(x, wqkv_ref[...], preferred_element_type=jnp.float32,
                  precision=precision)                         # (tr, 3*d_out)
    d_out = num_heads * head_dim
    for h in range(num_heads):  # static unroll; head-major slice-writes
        lo = h * head_dim
        q_ref[0, h] = qkv[:, lo:lo + head_dim].astype(q_ref.dtype)
        k_ref[0, h] = qkv[:, d_out + lo:d_out + lo + head_dim].astype(k_ref.dtype)
        v_ref[0, h] = qkv[:, 2 * d_out + lo:2 * d_out + lo + head_dim].astype(v_ref.dtype)


# ---------------- Kernel 2: flash attention + fused output projection ----------------
def _flash_attn_kernel(qi_ref, ki_ref,                       # scalar-prefetch (SMEM)
                       q_ref, k_ref, v_ref, wo_ref, bo_ref,  # inputs
                       o_ref,                                # output
                       m_sc, l_sc, acc_sc,                   # scratch
                       *, tq, tk, num_heads, precision):
    # q_ref: (1, H, tq, Dh) (pre-scaled by 1/sqrt(Dh)); k/v_ref: (1, H, tk, Dh)
    # wo_ref: (H, Dh, d_out); bo_ref: (1, d_out); o_ref: (1, tq, d_out)
    # scratch: m_sc/l_sc (H, tq, 1) f32, acc_sc (H, tq, Dh) f32
    t = pl.program_id(1)
    qi = qi_ref[t]
    ki = ki_ref[t]
    q_start = qi * tq
    k_start = ki * tk
    last_ki = (q_start + tq - 1) // tk          # last useful KV tile for this q tile

    @pl.when(ki == 0)
    def _init():
        m_sc[...] = jnp.full(m_sc.shape, _NEG_LARGE, m_sc.dtype)
        l_sc[...] = jnp.zeros(l_sc.shape, l_sc.dtype)
        acc_sc[...] = jnp.zeros(acc_sc.shape, acc_sc.dtype)

    def _attend(apply_mask):
        q = q_ref[0]                                           # (H, tq, Dh)
        k = k_ref[0]                                           # (H, tk, Dh)
        v = v_ref[0]                                           # (H, tk, Dh)
        s = jnp.einsum("hqd,hkd->hqk", q, k,
                       preferred_element_type=jnp.float32,
                       precision=precision)                    # (H, tq, tk)
        if apply_mask:
            rows = q_start + jax.lax.broadcasted_iota(jnp.int32, (tq, tk), 0)
            cols = k_start + jax.lax.broadcasted_iota(jnp.int32, (tq, tk), 1)
            s = jnp.where((cols <= rows)[None, :, :], s, _NEG_LARGE)
        m_prev = m_sc[...]
        m_new = jnp.maximum(m_prev, jnp.max(s, axis=-1, keepdims=True))
        alpha = jnp.exp(m_prev - m_new)
        p = jnp.exp(s - m_new)                                 # f32
        l_sc[...] = alpha * l_sc[...] + jnp.sum(p, axis=-1, keepdims=True)
        acc_sc[...] = alpha * acc_sc[...] + jnp.einsum(
            "hqk,hkd->hqd", p.astype(v.dtype), v,
            preferred_element_type=jnp.float32, precision=precision)
        m_sc[...] = m_new

    # Only lower-triangle tiles are ever enumerated; a tile either straddles the
    # diagonal (mask) or is fully below it (no mask).
    needs_mask = (k_start + tk - 1) > q_start

    @pl.when(jnp.logical_not(needs_mask))
    def _unmasked():
        _attend(apply_mask=False)

    @pl.when(needs_mask)
    def _masked():
        _attend(apply_mask=True)

    @pl.when(ki == last_ki)
    def _finalize():
        inv_l = 1.0 / l_sc[...]                 # exact: approx recip cost ~1e-3 rel err
        ctx = (acc_sc[...] * inv_l).astype(wo_ref.dtype)       # (H, tq, Dh)
        # Fused output projection: sum_h ctx_h @ Wo_h, as H plain 2-D MXU matmuls
        # accumulated in f32 registers (no (H, tq, d_out) intermediate).
        out = jnp.dot(ctx[0], wo_ref[0], preferred_element_type=jnp.float32,
                      precision=precision)
        for h in range(1, num_heads):
            out = out + jnp.dot(ctx[h], wo_ref[h], preferred_element_type=jnp.float32,
                                precision=precision)
        o_ref[0] = (out + bo_ref[...].astype(jnp.float32)).astype(o_ref.dtype)


def multi_head_attention(x, w_query, w_key, w_value, w_out, b_out, *,
                         num_heads, q_tile=128, kv_tile=128,
                         vmem_limit_bytes=None, precision=None):
    """x: (B, T, d_in). PyTorch-Linear weights (d_out, d_in) / (d_out, d_out).
    Returns (B, T, d_out)."""
    B, T, d_in = x.shape
    d_out = w_query.shape[0]
    assert d_out % num_heads == 0
    head_dim = d_out // num_heads
    dtype = x.dtype

    if precision is None:
        # f32 inputs: force accurate MXU passes so we match a full-precision reference.
        # bf16 inputs: default single-pass MXU (fast path).
        precision = (jax.lax.Precision.HIGHEST if dtype == jnp.float32
                     else jax.lax.Precision.DEFAULT)
    if vmem_limit_bytes is None:
        vmem_limit_bytes = _default_vmem_limit()

    # Host-side glue: fuse QKV weights (scale folded into Q), head-split Wo, bias row.
    scale = 1.0 / math.sqrt(head_dim)
    wqkv = jnp.concatenate(
        [w_query.T.astype(dtype) * jnp.asarray(scale, dtype),
         w_key.T.astype(dtype),
         w_value.T.astype(dtype)], axis=1)                     # (d_in, 3*d_out)
    wo_r = w_out.T.reshape(num_heads, head_dim, d_out).astype(dtype)
    bo = b_out.reshape(1, d_out).astype(jnp.float32)

    # ---------------- Kernel 1: fused QKV projection ----------------
    tr = _pick_tile(T, max(q_tile, kv_tile))
    qkv_kernel = functools.partial(_qkv_proj_kernel, num_heads=num_heads,
                                   head_dim=head_dim, precision=precision)
    q, k, v = pl.pallas_call(
        qkv_kernel,
        out_shape=tuple(jax.ShapeDtypeStruct((B, num_heads, T, head_dim), dtype)
                        for _ in range(3)),
        grid_spec=pltpu.PrefetchScalarGridSpec(
            num_scalar_prefetch=0,
            grid=(B, T // tr),
            in_specs=[
                pl.BlockSpec((1, tr, d_in), lambda b, r: (b, r, 0)),
                pl.BlockSpec((d_in, 3 * d_out), lambda b, r: (0, 0)),
            ],
            out_specs=[
                pl.BlockSpec((1, num_heads, tr, head_dim), lambda b, r: (b, 0, r, 0))
                for _ in range(3)
            ],
        ),
        compiler_params=pltpu.CompilerParams(
            dimension_semantics=("parallel", "parallel"),
            vmem_limit_bytes=vmem_limit_bytes),
    )(x, wqkv)

    # -------- Kernel 2: flash attention + fused output projection --------
    tq = _pick_tile(T, q_tile)
    tk = _pick_tile(T, kv_tile)
    n_q = T // tq
    n_k = T // tk

    # Flattened lower-triangle schedule: for every q tile, only the KV tiles that are
    # at least partially unmasked.  Fully-masked tiles never appear -> no DMA, no
    # dead grid steps (~0.35 us each), ~2x less K/V HBM traffic for causal attention.
    kv_counts = [min(((qi * tq + tq - 1) // tk) + 1, n_k) for qi in range(n_q)]
    qi_idx = np.concatenate(
        [np.full(c, qi, dtype=np.int32) for qi, c in enumerate(kv_counts)])
    ki_idx = np.concatenate([np.arange(c, dtype=np.int32) for c in kv_counts])
    n_steps = int(qi_idx.shape[0])
    qi_idx = jnp.asarray(qi_idx)
    ki_idx = jnp.asarray(ki_idx)

    attn_kernel = functools.partial(_flash_attn_kernel, tq=tq, tk=tk,
                                    num_heads=num_heads, precision=precision)
    out = pl.pallas_call(
        attn_kernel,
        out_shape=jax.ShapeDtypeStruct((B, T, d_out), dtype),
        grid_spec=pltpu.PrefetchScalarGridSpec(
            num_scalar_prefetch=2,                 # qi_idx, ki_idx -> SMEM
            grid=(B, n_steps),
            in_specs=[
                pl.BlockSpec((1, num_heads, tq, head_dim),
                             lambda b, t, qi_r, ki_r: (b, 0, qi_r[t], 0)),
                pl.BlockSpec((1, num_heads, tk, head_dim),
                             lambda b, t, qi_r, ki_r: (b, 0, ki_r[t], 0)),
                pl.BlockSpec((1, num_heads, tk, head_dim),
                             lambda b, t, qi_r, ki_r: (b, 0, ki_r[t], 0)),
                pl.BlockSpec((num_heads, head_dim, d_out),
                             lambda b, t, qi_r, ki_r: (0, 0, 0)),
                pl.BlockSpec((1, d_out), lambda b, t, qi_r, ki_r: (0, 0)),
            ],
            out_specs=pl.BlockSpec((1, tq, d_out),
                                   lambda b, t, qi_r, ki_r: (b, qi_r[t], 0)),
            scratch_shapes=[
                pltpu.VMEM((num_heads, tq, 1), jnp.float32),         # m
                pltpu.VMEM((num_heads, tq, 1), jnp.float32),         # l
                pltpu.VMEM((num_heads, tq, head_dim), jnp.float32),  # acc
            ],
        ),
        compiler_params=pltpu.CompilerParams(
            dimension_semantics=("parallel", "arbitrary"),
            vmem_limit_bytes=vmem_limit_bytes),
    )(qi_idx, ki_idx, q, k, v, wo_r, bo)
    return out


def reference_mha(x, w_query, w_key, w_value, w_out, b_out, *, num_heads,
                  precision=jax.lax.Precision.HIGHEST):
    """Pure-JAX reference mirroring the PyTorch forward pass (accurate matmuls)."""
    B, T, d_in = x.shape
    d_out = w_query.shape[0]
    head_dim = d_out // num_heads

    q = jnp.einsum("btd,od->bto", x, w_query, precision=precision)
    k = jnp.einsum("btd,od->bto", x, w_key, precision=precision)
    v = jnp.einsum("btd,od->bto", x, w_value, precision=precision)

    def split(t):  # (B, T, d_out) -> (B, H, T, Dh)
        return t.reshape(B, T, num_heads, head_dim).transpose(0, 2, 1, 3)

    q, k, v = split(q), split(k), split(v)
    scores = jnp.einsum("bhqd,bhkd->bhqk", q, k, precision=precision)
    scores = scores / (head_dim ** 0.5)
    mask = jnp.triu(jnp.ones((T, T), dtype=bool), k=1)
    scores = jnp.where(mask, -jnp.inf, scores)
    w = jax.nn.softmax(scores, axis=-1)
    ctx = jnp.einsum("bhqk,bhkd->bhqd", w, v, precision=precision)
    ctx = ctx.transpose(0, 2, 1, 3).reshape(B, T, d_out)
    return jnp.einsum("bto,no->btn", ctx, w_out, precision=precision) + b_out


if __name__ == "__main__":
    # Make any precision-unspecified matmuls accurate as well (belt and braces).
    jax.config.update("jax_default_matmul_precision", "highest")

    def run_case(B, T, d_in, d_out, num_heads, case):
        key = jax.random.fold_in(jax.random.PRNGKey(0), case)
        kx, kq, kk, kv, ko, kb = jax.random.split(key, 6)

        x = jax.random.normal(kx, (B, T, d_in), dtype=jnp.float32)
        # PyTorch Linear weight layout: (out_features, in_features).
        w_query = jax.random.normal(kq, (d_out, d_in), dtype=jnp.float32) * 0.1
        w_key = jax.random.normal(kk, (d_out, d_in), dtype=jnp.float32) * 0.1
        w_value = jax.random.normal(kv, (d_out, d_in), dtype=jnp.float32) * 0.1
        w_out = jax.random.normal(ko, (d_out, d_out), dtype=jnp.float32) * 0.1
        b_out = jax.random.normal(kb, (d_out,), dtype=jnp.float32) * 0.1

        out = multi_head_attention(x, w_query, w_key, w_value, w_out, b_out,
                                   num_heads=num_heads)
        out = jax.block_until_ready(out)

        ref = reference_mha(x, w_query, w_key, w_value, w_out, b_out,
                            num_heads=num_heads)
        assert out.shape == (B, T, d_out)
        err = jnp.max(jnp.abs(out - ref))
        # Tolerance sized for TPU MXU f32 semantics (multi-pass bf16 matmuls).
        assert jnp.allclose(out, ref, atol=1e-2, rtol=1e-2), \
            f"mismatch vs reference (case {case}): max err {err}"

    # Small, module-consistent shapes (single-tile path).
    run_case(B=2, T=8, d_in=16, d_out=32, num_heads=2, case=0)
    # Multi-tile case exercising the flash path: unmasked / diagonal tiles, and the
    # flattened causal schedule (fully-masked tiles never enumerated).
    run_case(B=2, T=256, d_in=64, d_out=128, num_heads=4, case=1)

    print("KERNEL_OK")
</pallas_src>

<mosaic_0001>
module attributes {stable_mosaic.version = 11 : i64} {
  func.func @_qkv_proj_kernel(%arg0: i32, %arg1: i32, %arg2: memref<1x8x16xf32, #tpu.memory_space<vmem>>, %arg3: memref<16x96xf32, #tpu.memory_space<vmem>>, %arg4: memref<1x2x8x16xf32, #tpu.memory_space<vmem>>, %arg5: memref<1x2x8x16xf32, #tpu.memory_space<vmem>>, %arg6: memref<1x2x8x16xf32, #tpu.memory_space<vmem>>) attributes {dimension_semantics = [#tpu.dimension_semantics<parallel>, #tpu.dimension_semantics<parallel>], iteration_bounds = array<i64: 2, 1>, scalar_prefetch = 0 : i64, scratch_operands = 0 : i64, tpu.core_type = #tpu.core_type<tc>, window_params = [{transform_indices = @transform_0, window_bounds = array<i64: 1, 8, 16>}, {pipeline_mode = #tpu.pipeline_mode<synchronous>, transform_indices = @transform_1, window_bounds = array<i64: 16, 96>}, {transform_indices = @transform_2, window_bounds = array<i64: 1, 2, 8, 16>}, {transform_indices = @transform_3, window_bounds = array<i64: 1, 2, 8, 16>}, {transform_indices = @transform_4, window_bounds = array<i64: 1, 2, 8, 16>}]} {
    %c0 = arith.constant 0 : index
    %c0_0 = arith.constant 0 : index
    %c0_1 = arith.constant 0 : index
    %0 = vector.load %arg2[%c0, %c0_0, %c0_1] : memref<1x8x16xf32, #tpu.memory_space<vmem>>, vector<1x8x16xf32>
    %1 = vector.shape_cast %0 : vector<1x8x16xf32> to vector<8x16xf32>
    %c0_2 = arith.constant 0 : index
    %c0_3 = arith.constant 0 : index
    %2 = vector.load %arg3[%c0_2, %c0_3] : memref<16x96xf32, #tpu.memory_space<vmem>>, vector<16x96xf32>
    %cst = arith.constant dense<0.000000e+00> : vector<8x96xf32>
    %3 = tpu.matmul %1, %2, %cst {dimension_numbers = #tpu.dot_dimension_numbers<[1], [0], [0], [1], [0, 0, 1, 1], [], []>, precision = #tpu.contract_precision<fp32>} : vector<8x16xf32>, vector<16x96xf32>, vector<8x96xf32> -> vector<8x96xf32>
    %4 = vector.extract_strided_slice %3 {offsets = [0, 0], sizes = [8, 16], strides = [1, 1]} : vector<8x96xf32> to vector<8x16xf32>
    %c0_4 = arith.constant 0 : index
    %c0_5 = arith.constant 0 : index
    %c0_6 = arith.constant 0 : index
    %c0_7 = arith.constant 0 : index
    %5 = vector.load %arg4[%c0_4, %c0_5, %c0_6, %c0_7] : memref<1x2x8x16xf32, #tpu.memory_space<vmem>>, vector<1x1x8x16xf32>
    %6 = vector.shape_cast %5 : vector<1x1x8x16xf32> to vector<8x16xf32>
    %7 = vector.shape_cast %4 : vector<8x16xf32> to vector<1x1x8x16xf32>
    tpu.vector_store %arg4[%c0_4, %c0_5, %c0_6, %c0_7], %7 {strides = array<i32>} : memref<1x2x8x16xf32, #tpu.memory_space<vmem>>, vector<1x1x8x16xf32>,
    %8 = vector.extract_strided_slice %3 {offsets = [0, 32], sizes = [8, 16], strides = [1, 1]} : vector<8x96xf32> to vector<8x16xf32>
    %c0_8 = arith.constant 0 : index
    %c0_9 = arith.constant 0 : index
    %c0_10 = arith.constant 0 : index
    %c0_11 = arith.constant 0 : index
    %9 = vector.load %arg5[%c0_8, %c0_9, %c0_10, %c0_11] : memref<1x2x8x16xf32, #tpu.memory_space<vmem>>, vector<1x1x8x16xf32>
    %10 = vector.shape_cast %9 : vector<1x1x8x16xf32> to vector<8x16xf32>
    %11 = vector.shape_cast %8 : vector<8x16xf32> to vector<1x1x8x16xf32>
    tpu.vector_store %arg5[%c0_8, %c0_9, %c0_10, %c0_11], %11 {strides = array<i32>} : memref<1x2x8x16xf32, #tpu.memory_space<vmem>>, vector<1x1x8x16xf32>,
    %12 = vector.extract_strided_slice %3 {offsets = [0, 64], sizes = [8, 16], strides = [1, 1]} : vector<8x96xf32> to vector<8x16xf32>
    %c0_12 = arith.constant 0 : index
    %c0_13 = arith.constant 0 : index
    %c0_14 = arith.constant 0 : index
    %c0_15 = arith.constant 0 : index
    %13 = vector.load %arg6[%c0_12, %c0_13, %c0_14, %c0_15] : memref<1x2x8x16xf32, #tpu.memory_space<vmem>>, vector<1x1x8x16xf32>
    %14 = vector.shape_cast %13 : vector<1x1x8x16xf32> to vector<8x16xf32>
    %15 = vector.shape_cast %12 : vector<8x16xf32> to vector<1x1x8x16xf32>
    tpu.vector_store %arg6[%c0_12, %c0_13, %c0_14, %c0_15], %15 {strides = array<i32>} : memref<1x2x8x16xf32, #tpu.memory_space<vmem>>, vector<1x1x8x16xf32>,
    %16 = vector.extract_strided_slice %3 {offsets = [0, 16], sizes = [8, 16], strides = [1, 1]} : vector<8x96xf32> to vector<8x16xf32>
    %c0_16 = arith.constant 0 : index
    %c1 = arith.constant 1 : index
    %c0_17 = arith.constant 0 : index
    %c0_18 = arith.constant 0 : index
    %17 = vector.load %arg4[%c0_16, %c1, %c0_17, %c0_18] : memref<1x2x8x16xf32, #tpu.memory_space<vmem>>, vector<1x1x8x16xf32>
    %18 = vector.shape_cast %17 : vector<1x1x8x16xf32> to vector<8x16xf32>
    %19 = vector.shape_cast %16 : vector<8x16xf32> to vector<1x1x8x16xf32>
    tpu.vector_store %arg4[%c0_16, %c1, %c0_17, %c0_18], %19 {strides = array<i32>} : memref<1x2x8x16xf32, #tpu.memory_space<vmem>>, vector<1x1x8x16xf32>,
    %20 = vector.extract_strided_slice %3 {offsets = [0, 48], sizes = [8, 16], strides = [1, 1]} : vector<8x96xf32> to vector<8x16xf32>
    %c0_19 = arith.constant 0 : index
    %c1_20 = arith.constant 1 : index
    %c0_21 = arith.constant 0 : index
    %c0_22 = arith.constant 0 : index
    %21 = vector.load %arg5[%c0_19, %c1_20, %c0_21, %c0_22] : memref<1x2x8x16xf32, #tpu.memory_space<vmem>>, vector<1x1x8x16xf32>
    %22 = vector.shape_cast %21 : vector<1x1x8x16xf32> to vector<8x16xf32>
    %23 = vector.shape_cast %20 : vector<8x16xf32> to vector<1x1x8x16xf32>
    tpu.vector_store %arg5[%c0_19, %c1_20, %c0_21, %c0_22], %23 {strides = array<i32>} : memref<1x2x8x16xf32, #tpu.memory_space<vmem>>, vector<1x1x8x16xf32>,
    %24 = vector.extract_strided_slice %3 {offsets = [0, 80], sizes = [8, 16], strides = [1, 1]} : vector<8x96xf32> to vector<8x16xf32>
    %c0_23 = arith.constant 0 : index
    %c1_24 = arith.constant 1 : index
    %c0_25 = arith.constant 0 : index
    %c0_26 = arith.constant 0 : index
    %25 = vector.load %arg6[%c0_23, %c1_24, %c0_25, %c0_26] : memref<1x2x8x16xf32, #tpu.memory_space<vmem>>, vector<1x1x8x16xf32>
    %26 = vector.shape_cast %25 : vector<1x1x8x16xf32> to vector<8x16xf32>
    %27 = vector.shape_cast %24 : vector<8x16xf32> to vector<1x1x8x16xf32>
    tpu.vector_store %arg6[%c0_23, %c1_24, %c0_25, %c0_26], %27 {strides = array<i32>} : memref<1x2x8x16xf32, #tpu.memory_space<vmem>>, vector<1x1x8x16xf32>,
    return
  }
  func.func @transform_0(%arg0: i32, %arg1: i32) -> (i32, i32, i32) {
    %c0_i32 = arith.constant 0 : i32
    %c0_i32_0 = arith.constant 0 : i32
    return %arg0, %arg1, %c0_i32 : i32, i32, i32
  }
  func.func @transform_1(%arg0: i32, %arg1: i32) -> (i32, i32) {
    %c0_i32 = arith.constant 0 : i32
    %c0_i32_0 = arith.constant 0 : i32
    %c0_i32_1 = arith.constant 0 : i32
    return %c0_i32, %c0_i32_0 : i32, i32
  }
  func.func @transform_2(%arg0: i32, %arg1: i32) -> (i32, i32, i32, i32) {
    %c0_i32 = arith.constant 0 : i32
    %c0_i32_0 = arith.constant 0 : i32
    %c0_i32_1 = arith.constant 0 : i32
    return %arg0, %c0_i32, %arg1, %c0_i32_0 : i32, i32, i32, i32
  }
  func.func @transform_3(%arg0: i32, %arg1: i32) -> (i32, i32, i32, i32) {
    %c0_i32 = arith.constant 0 : i32
    %c0_i32_0 = arith.constant 0 : i32
    %c0_i32_1 = arith.constant 0 : i32
    return %arg0, %c0_i32, %arg1, %c0_i32_0 : i32, i32, i32, i32
  }
  func.func @transform_4(%arg0: i32, %arg1: i32) -> (i32, i32, i32, i32) {
    %c0_i32 = arith.constant 0 : i32
    %c0_i32_0 = arith.constant 0 : i32
    %c0_i32_1 = arith.constant 0 : i32
    return %arg0, %c0_i32, %arg1, %c0_i32_0 : i32, i32, i32, i32
  }
}

</mosaic_0001>

<llo_original>
// kernel: tpu_custom_call.1
$region0: #{tpu_custom_call.1}
  #allocation0 [shape = 'u32[]', space=smem, size = 0x4, offset = 0x4, fixed_abs, tag = 'smem constant byte address 0x4 - core index']
  #allocation1 [shape = 'u32[144,128]{1,0:T(1,128)}', space=vmem, size = 0x12000, scoped, tag = 'internal scratch']
  %s0 = inlined_call_operand.hbm [shape: f32[2,8,16], index: 0, kind: input, shape index: {}]
  %s1 = inlined_call_operand.hbm [shape: f32[16,96], index: 1, kind: input, shape index: {}]
  %s2 = inlined_call_operand.hbm [shape: f32[2,2,8,16], index: 2, kind: output, shape index: {0}]
  %s3 = inlined_call_operand.hbm [shape: f32[2,2,8,16], index: 3, kind: output, shape index: {1}]
  %s4 = inlined_call_operand.hbm [shape: f32[2,2,8,16], index: 4, kind: output, shape index: {2}]
  %5 = xla_tuple %s2, %s3, %s4
  %s6 = sld [smem:[#allocation0]]
  $region65: #{tpu_custom_call.1} parent=0
    _
  %s8 = ssub.s32 1, %s6
  %s9 = scalar_select 0, %s8, %s6
  $region1: #{tpu_custom_call.1} parent=0
    #allocation2 [shape = 'u8[8192]{0}', space=vmem, size = 0x2000, scoped, tag = 'input window, operand 0']
    #allocation3 [shape = 's32[2]{0}', space=sflag, size = 0x8, scoped, tag = 'scoped memory for tpu_custom_call.1']
    #allocation4 [shape = 's32[2]{0}', space=sflag, size = 0x8, scoped, tag = 'scoped memory for tpu_custom_call.1']
    #allocation5 [shape = 'u8[8192]{0}', space=vmem, size = 0x2000, scoped, tag = 'input window, operand 1, single buffered']
    #allocation6 [shape = 's32[1]{0}', space=sflag, size = 0x4, scoped, tag = 'scoped memory for tpu_custom_call.1']
    #allocation7 [shape = 'u8[16384]{0}', space=vmem, size = 0x4000, scoped, tag = 'output window, operand 0']
    #allocation8 [shape = 'u8[16384]{0}', space=vmem, size = 0x4000, scoped, tag = 'output window, operand 1']
    #allocation9 [shape = 's32[2]{0}', space=sflag, size = 0x8, scoped, tag = 'scoped memory for tpu_custom_call.1']
    #allocation10 [shape = 'u8[16384]{0}', space=vmem, size = 0x4000, scoped, tag = 'output window, operand 2']
    %10 = vsyncpa [#allocation3], 0
    %s11 = scalar_lea.sflag [#allocation3], 1
    %12 = vsyncpa %s11, 0
    %13 = vsyncpa [#allocation6], 0
    %14 = vsyncpa [#allocation4], 0
    %s15 = scalar_lea.sflag [#allocation4], 1
    %16 = vsyncpa %s15, 0
    %17 = vsyncpa [#allocation9], 0
    %s18 = scalar_lea.sflag [#allocation9], 1
    %19 = vsyncpa %s18, 0
    loop: start=0, step=1, limit=4
    $region2: #{tpu_custom_call.1} parent=1 // loop_pre_header
      _
    $region3: #{tpu_custom_call.1} parent=1 // loop_header
      %s21 = sphi 0, %s25
      %p22 = scmp.ge.s32.totalorder %s21, 4
      %s28 = sphi 0, %s40
      %s29 = sphi 0, %s36
      %s30 = sphi 0, %s28
      %s31 = sphi 0, %s29
      %s32 = sphi 0, %s30
      %s33 = sphi 0, %s31
      %s45 = sphi 0, %s47
      %s48 = sphi 0, %s45
      %s49 = sphi 0, %s48
      %s65 = sphi 0, %s49
      %s69 = sphi 0, %s69
      %s71 = sphi 0, %s69
      %s72 = sphi 0, %s71
      %s86 = sphi 0, %s72
      %s94 = sphi 0, %s96
      %s97 = sphi 0, %s94
      %s98 = sphi 0, %s97
      %s114 = sphi 0, %s98
      %s122 = sphi 0, %s124
      %s125 = sphi 0, %s122
      %s126 = sphi 0, %s125
      %s142 = sphi 0, %s126
      %s150 = sphi 0, %s152
      %s153 = sphi 0, %s150
      %s154 = sphi 0, %s153
      %s170 = sphi 0, %s154
    $region4: #{tpu_custom_call.1} parent=1 // loop_header_branch
      %24 = sbr.rel (%p22) target = $region8
    $region5: #{tpu_custom_call.1} parent=1 // loop_body
      %s26 = ssub.s32 %s21, 1
      %s27 = ssub.s32 %s21, 2
      %s34 = sadd.s32 1, %s29
      %p35 = scmp.ge.s32.totalorder %s34, 1
      %s36 = scalar_select %p35, 0, %s34
      %s37 = sadd.s32 1, %s28
      %s38 = scalar_select %p35, %s37, %s28
      %p39 = scmp.ge.s32.totalorder %s38, 2
      %s40 = scalar_select %p39, 0, %s38
      %s41 = ssub.s32 %s28, %s40
      %s42 = ssub.s32 %s29, %s36
      %s43 = sor.u32 %s41, %s42
      %p44 = scmp.eq.s32.totalorder %s43, 0
      %s46 = sadd.s32 %s45, 1
      %s47 = scalar_select %p44, %s45, %s46
      %p50 = pneg %p44
      %p51 = scmp.eq.s32.totalorder %s21, 1
      %p52 = por %p50, %p51
      %p53 = scmp.ne.s32.totalorder %s45, %s48
      %p54 = scmp.eq.s32.totalorder %s21, 0
      %p55 = por %p53, %p54
      %p56 = scmp.ne.s32.totalorder %s45, %s48
      %p57 = scmp.eq.s32.totalorder %s26, 1
      %p58 = por %p56, %p57
      %p59 = scmp.ne.s32.totalorder %s48, %s49
      %p60 = scmp.eq.s32.totalorder %s26, 0
      %p61 = por %p59, %p60
      %p62 = scmp.ne.s32.totalorder %s48, %s49
      %p63 = scmp.eq.s32.totalorder %s27, 1
      %p64 = por %p62, %p63
      %p66 = scmp.ne.s32.totalorder %s49, %s65
      %p67 = scmp.eq.s32.totalorder %s27, 0
      %p68 = por %p66, %p67
      %s70 = sadd.s32 %s69, 1
      %p73 = scmp.eq.s32.totalorder %s21, 1
      %p74 = scmp.ne.s32.totalorder %s69, %s71
      %p75 = scmp.eq.s32.totalorder %s21, 0
      %p76 = por %p74, %p75
      %p77 = scmp.ne.s32.totalorder %s69, %s71
      %p78 = scmp.eq.s32.totalorder %s26, 1
      %p79 = por %p77, %p78
      %p80 = scmp.ne.s32.totalorder %s71, %s72
      %p81 = scmp.eq.s32.totalorder %s26, 0
      %p82 = por %p80, %p81
      %p83 = scmp.ne.s32.totalorder %s71, %s72
      %p84 = scmp.eq.s32.totalorder %s27, 1
      %p85 = por %p83, %p84
      %p87 = scmp.ne.s32.totalorder %s72, %s86
      %p88 = scmp.eq.s32.totalorder %s27, 0
      %p89 = por %p87, %p88
      %s90 = ssub.s32 %s28, %s40
      %s91 = ssub.s32 %s29, %s36
      %s92 = sor.u32 %s90, %s91
      %p93 = scmp.eq.s32.totalorder %s92, 0
      %s95 = sadd.s32 %s94, 1
      %s96 = scalar_select %p93, %s94, %s95
      %p99 = pneg %p93
      %p100 = scmp.eq.s32.totalorder %s21, 1
      %p101 = por %p99, %p100
      %p102 = scmp.ne.s32.totalorder %s94, %s97
      %p103 = scmp.eq.s32.totalorder %s21, 0
      %p104 = por %p102, %p103
      %p105 = scmp.ne.s32.totalorder %s94, %s97
      %p106 = scmp.eq.s32.totalorder %s26, 1
      %p107 = por %p105, %p106
      %p108 = scmp.ne.s32.totalorder %s97, %s98
      %p109 = scmp.eq.s32.totalorder %s26, 0
      %p110 = por %p108, %p109
      %p111 = scmp.ne.s32.totalorder %s97, %s98
      %p112 = scmp.eq.s32.totalorder %s27, 1
      %p113 = por %p111, %p112
      %p115 = scmp.ne.s32.totalorder %s98, %s114
      %p116 = scmp.eq.s32.totalorder %s27, 0
      %p117 = por %p115, %p116
      %s118 = ssub.s32 %s28, %s40
      %s119 = ssub.s32 %s29, %s36
      %s120 = sor.u32 %s118, %s119
      %p121 = scmp.eq.s32.totalorder %s120, 0
      %s123 = sadd.s32 %s122, 1
      %s124 = scalar_select %p121, %s122, %s123
      %p127 = pneg %p121
      %p128 = scmp.eq.s32.totalorder %s21, 1
      %p129 = por %p127, %p128
      %p130 = scmp.ne.s32.totalorder %s122, %s125
      %p131 = scmp.eq.s32.totalorder %s21, 0
      %p132 = por %p130, %p131
      %p133 = scmp.ne.s32.totalorder %s122, %s125
      %p134 = scmp.eq.s32.totalorder %s26, 1
      %p135 = por %p133, %p134
      %p136 = scmp.ne.s32.totalorder %s125, %s126
      %p137 = scmp.eq.s32.totalorder %s26, 0
      %p138 = por %p136, %p137
      %p139 = scmp.ne.s32.totalorder %s125, %s126
      %p140 = scmp.eq.s32.totalorder %s27, 1
      %p141 = por %p139, %p140
      %p143 = scmp.ne.s32.totalorder %s126, %s142
      %p144 = scmp.eq.s32.totalorder %s27, 0
      %p145 = por %p143, %p144
      %s146 = ssub.s32 %s28, %s40
      %s147 = ssub.s32 %s29, %s36
      %s148 = sor.u32 %s146, %s147
      %p149 = scmp.eq.s32.totalorder %s148, 0
      %s151 = sadd.s32 %s150, 1
      %s152 = scalar_select %p149, %s150, %s151
      %p155 = pneg %p149
      %p156 = scmp.eq.s32.totalorder %s21, 1
      %p157 = por %p155, %p156
      %p158 = scmp.ne.s32.totalorder %s150, %s153
      %p159 = scmp.eq.s32.totalorder %s21, 0
      %p160 = por %p158, %p159
      %p161 = scmp.ne.s32.totalorder %s150, %s153
      %p162 = scmp.eq.s32.totalorder %s26, 1
      %p163 = por %p161, %p162
      %p164 = scmp.ne.s32.totalorder %s153, %s154
      %p165 = scmp.eq.s32.totalorder %s26, 0
      %p166 = por %p164, %p165
      %p167 = scmp.ne.s32.totalorder %s153, %s154
      %p168 = scmp.eq.s32.totalorder %s27, 1
      %p169 = por %p167, %p168
      %p171 = scmp.ne.s32.totalorder %s154, %s170
      %p172 = scmp.eq.s32.totalorder %s27, 0
      %p173 = por %p171, %p172
      %p174 = scmp.le.s32.totalorder 1, %s21
      %p175 = scmp.lt.s32.totalorder %s21, 3
      %p176 = pnand %p174, %p175
      %p177 = pneg %p176
      // Predicated region
      $region9: #{tpu_custom_call.1} parent=5 // pred_check
        _
      $region10: #{tpu_custom_call.1} parent=5 // pred_check_branch
        %179 = sbr.rel (%p176) target = $region12
      $region11: #{tpu_custom_call.1} parent=5 // pred_region
        %s180 = ssub.s32 %s21, 1
        // Predicated region
        $region13: #{tpu_custom_call.1} parent=11 // pred_check
          %p181 = pneg %p82
        $region14: #{tpu_custom_call.1} parent=11 // pred_check_branch
          %183 = sbr.rel (%p181) target = $region16
        $region15: #{tpu_custom_call.1} parent=11 // pred_region
          %s185 = ssub.s32 256, 256
          %186 = vsyncadd [#allocation6], %s185
          %s187 = sshll.u32 [#allocation5], 4
          %s188 = int_to_ptr.vmem [resolvable:$true] %s187
          %193 = dma.hbm_to_vmem [thread:$0]  %s1, 256, %s188, [#allocation6], 128, 128, 8
        $region16: #{tpu_custom_call.1} parent=11 // pred_fallthru
          _
      $region12: #{tpu_custom_call.1} parent=5 // pred_fallthru
        _
      %p194 = scmp.lt.s32.totalorder %s21, 2
      // Predicated region
      $region17: #{tpu_custom_call.1} parent=5 // pred_check
        %p195 = pneg %p194
      $region18: #{tpu_custom_call.1} parent=5 // pred_check_branch
        %197 = sbr.rel (%p195) target = $region20
      $region19: #{tpu_custom_call.1} parent=5 // pred_region
        // Predicated region
        $region21: #{tpu_custom_call.1} parent=19 // pred_check
          %p198 = pneg %p55
        $region22: #{tpu_custom_call.1} parent=19 // pred_check_branch
          %200 = sbr.rel (%p198) target = $region24
        $region23: #{tpu_custom_call.1} parent=19 // pred_region
          %s201 = sand.u32 %s45, 1
          %s202 = scalar_lea.sflag [#allocation3], %s201
          %s203 = sand.u32 %s45, 1
          %s204 = smul.addr %s203, 8
          %s205 = scalar_lea.vmem [#allocation2], %s204
          %s207 = ssub.s32 128, 128
          %208 = vsyncadd %s202, %s207
          %s209 = sadd.s32 %s29, %s28
          %s210 = smul.addr %s209, 128
          %s211 = scalar_lea.hbm %s0, %s210
          %s213 = sshll.u32 %s205, 4
          %s214 = int_to_ptr.vmem [resolvable:$true] %s213
          %216 = dma.hbm_to_vmem [thread:$0]  %s211, 128, %s214, %s202
        $region24: #{tpu_custom_call.1} parent=19 // pred_fallthru
          _
      $region20: #{tpu_custom_call.1} parent=5 // pred_fallthru
        _
      %p217 = scmp.le.s32.totalorder 1, %s21
      %p218 = scmp.lt.s32.totalorder %s21, 3
      %p219 = pnand %p217, %p218
      %p220 = pneg %p219
      // Predicated region
      $region25: #{tpu_custom_call.1} parent=5 // pred_check
        _
      $region26: #{tpu_custom_call.1} parent=5 // pred_check_branch
        %222 = sbr.rel (%p219) target = $region28
      $region27: #{tpu_custom_call.1} parent=5 // pred_region
        %s223 = ssub.s32 %s21, 1
        %s224 = sand.u32 %s48, 1
        %s225 = scalar_lea.sflag [#allocation3], %s224
        %s226 = sand.u32 %s48, 1
        %s227 = smul.addr %s226, 8
        %s228 = scalar_lea.vmem [#allocation2], %s227
        // Predicated region
        $region29: #{tpu_custom_call.1} parent=27 // pred_check
          %p229 = pneg %p61
        $region30: #{tpu_custom_call.1} parent=27 // pred_check_branch
          %231 = sbr.rel (%p229) target = $region32
        $region31: #{tpu_custom_call.1} parent=27 // pred_region
          %232 = dma.done %s225, 128
        $region32: #{tpu_custom_call.1} parent=27 // pred_fallthru
          _
        // Predicated region
        $region33: #{tpu_custom_call.1} parent=27 // pred_check
          %p233 = pneg %p82
        $region34: #{tpu_custom_call.1} parent=27 // pred_check_branch
          %235 = sbr.rel (%p233) target = $region36
        $region35: #{tpu_custom_call.1} parent=27 // pred_region
          %236 = dma.done [#allocation6], 256
        $region36: #{tpu_custom_call.1} parent=27 // pred_fallthru
          _
        %s237 = sand.u32 %s48, 1
        %s238 = scalar_lea.sflag [#allocation3], %s237
        %s239 = sand.u32 %s48, 1
        %s240 = smul.addr %s239, 8
        %s241 = scalar_lea.vmem [#allocation2], %s240
        %p242 = pneg %p61
        %p243 = pneg %p58
        %p244 = pneg %p82
        %p245 = pneg %p79
        %p246 = pneg %p110
        %p247 = pneg %p107
        %s248 = sand.u32 %s97, 1
        %s249 = scalar_lea.sflag [#allocation4], %s248
        %s250 = sand.u32 %s97, 1
        %s251 = smul.addr %s250, 16
        %s252 = scalar_lea.vmem [#allocation7], %s251
        %p253 = pneg %p138
        %p254 = pneg %p135
        %s255 = sand.u32 %s26, 1
        %s256 = scalar_lea.sflag [#allocation9], %s255
        %s257 = sand.u32 %s125, 1
        %s258 = smul.addr %s257, 16
        %s259 = scalar_lea.vmem [#allocation8], %s258
        %p260 = pneg %p166
        %p261 = pneg %p163
        %s262 = sand.u32 %s26, 1
        %s263 = scalar_lea.sflag [#allocation9], %s262
        %s264 = sand.u32 %s153, 1
        %s265 = smul.addr %s264, 16
        %s266 = scalar_lea.vmem [#allocation10], %s265
        %v267 = vld [vmem:[%s228] sm:$0xff]
        %v268 = vld [vmem:[#allocation5] sm:$0xff]
        %v269 = vld [vmem:[#allocation5 + $0x8] sm:$0xff]
        %vm270 = vcmask 130048
        %v272 = vsel %vm270, %v267, 0
        %274 = vmatprep.subr.mxu0 0.0
        %275 = vmatpush1.msra.mxu0 0.0
        %276 = vmatprep.subr.mxu0 0.0
        %277 = vmatpush1.msra.mxu0 0.0
        %278 = vmatprep.subr.mxu0 0.0
        %279 = vmatpush1.msra.mxu0 0.0
        %280 = vmatprep.subr.mxu0 0.0
        %281 = vmatpush1.msra.mxu0 0.0
        %282 = vmatprep.subr.mxu0 0.0
        %283 = vmatpush1.msra.mxu0 0.0
        %284 = vmatprep.subr.mxu0 0.0
        %285 = vmatpush1.msra.mxu0 0.0
        %286 = vmatprep.subr.mxu0 0.0
        %287 = vmatpush1.msra.mxu0 0.0
        %288 = vmatprep.subr.mxu0 0.0
        %289 = vmatpush1.msra.mxu0 0.0
        %290 = vmatprep.subr.mxu0 0.0
        %291 = vmatpush1.msra.mxu0 0.0
        %292 = vmatprep.subr.mxu0 0.0
        %293 = vmatpush1.msra.mxu0 0.0
        %294 = vmatprep.subr.mxu0 0.0
        %295 = vmatpush1.msra.mxu0 0.0
        %296 = vmatprep.subr.mxu0 0.0
        %297 = vmatpush1.msra.mxu0 0.0
        %298 = vmatprep.subr.mxu0 0.0
        %299 = vmatpush1.msra.mxu0 0.0
        %300 = vmatprep.subr.mxu0 0.0
        %301 = vmatpush1.msra.mxu0 0.0
        %302 = vmatprep.subr.mxu0 0.0
        %v303 = vand.u32 %v269, 4294901760
        %304 = vmatpush1.msra.mxu0 %v303
        %305 = vmatprep.subr.mxu0 0.0
        %v306 = vand.u32 %v268, 4294901760
        %307 = vmatpush1.msra.mxu0 %v306
        %308 = vmatprep.subr.mxu0 0.0
        %309 = vmatpush2.msra.mxu0 0.0
        %310 = vmatprep.subr.mxu0 0.0
        %311 = vmatpush2.msra.mxu0 0.0
        %312 = vmatprep.subr.mxu0 0.0
        %313 = vmatpush2.msra.mxu0 0.0
        %314 = vmatprep.subr.mxu0 0.0
        %315 = vmatpush2.msra.mxu0 0.0
        %316 = vmatprep.subr.mxu0 0.0
        %317 = vmatpush2.msra.mxu0 0.0
        %318 = vmatprep.subr.mxu0 0.0
        %319 = vmatpush2.msra.mxu0 0.0
        %320 = vmatprep.subr.mxu0 0.0
        %321 = vmatpush2.msra.mxu0 0.0
        %322 = vmatprep.subr.mxu0 0.0
        %323 = vmatpush2.msra.mxu0 0.0
        %324 = vmatprep.subr.mxu0 0.0
        %325 = vmatpush2.msra.mxu0 0.0
        %326 = vmatprep.subr.mxu0 0.0
        %327 = vmatpush2.msra.mxu0 0.0
        %328 = vmatprep.subr.mxu0 0.0
        %329 = vmatpush2.msra.mxu0 0.0
        %330 = vmatprep.subr.mxu0 0.0
        %331 = vmatpush2.msra.mxu0 0.0
        %332 = vmatprep.subr.mxu0 0.0
        %333 = vmatpush2.msra.mxu0 0.0
        %334 = vmatprep.subr.mxu0 0.0
        %335 = vmatpush2.msra.mxu0 0.0
        %336 = vmatprep.subr.mxu0 0.0
        %337 = vmatpush2.msra.mxu0 0.0
        %338 = vmatprep.subr.mxu0 0.0
        %339 = vmatpush2.msra.mxu0 0.0
        %340 = vmatprep.mubr.f32.mxu0 0.0
        %v341 = vand.u32 %v272, 4294901760
        %v342 = vsub.f32 %v272, %v341
        %v343 = vand.u32 %v342, 4294901760
        %v344 = vsub.f32 %v342, %v343
        %v345 = vand.u32 %v344, 4294901760
        %346 = vmatmul.mubr.f32.gmra.mxu0 %v345
        %v347 = vpop.f32.mrf.mxu0
        %v348 = vadd.f32 0.0, %v347
        %v349 = vpop.f32.mrf.mxu0
        %350 = vdwg.mxu0
        %351 = vmatprep.subr.mxu0 0.0
        %352 = vmatpush1.msra.mxu0 0.0
        %353 = vmatprep.subr.mxu0 0.0
        %354 = vmatpush1.msra.mxu0 0.0
        %355 = vmatprep.subr.mxu0 0.0
        %356 = vmatpush1.msra.mxu0 0.0
        %357 = vmatprep.subr.mxu0 0.0
        %358 = vmatpush1.msra.mxu0 0.0
        %359 = vmatprep.subr.mxu0 0.0
        %360 = vmatpush1.msra.mxu0 0.0
        %361 = vmatprep.subr.mxu0 0.0
        %362 = vmatpush1.msra.mxu0 0.0
        %363 = vmatprep.subr.mxu0 0.0
        %364 = vmatpush1.msra.mxu0 0.0
        %365 = vmatprep.subr.mxu0 0.0
        %366 = vmatpush1.msra.mxu0 0.0
        %367 = vmatprep.subr.mxu0 0.0
        %368 = vmatpush1.msra.mxu0 0.0
        %369 = vmatprep.subr.mxu0 0.0
        %370 = vmatpush1.msra.mxu0 0.0
        %371 = vmatprep.subr.mxu0 0.0
        %372 = vmatpush1.msra.mxu0 0.0
        %373 = vmatprep.subr.mxu0 0.0
        %374 = vmatpush1.msra.mxu0 0.0
        %375 = vmatprep.subr.mxu0 0.0
        %376 = vmatpush1.msra.mxu0 0.0
        %377 = vmatprep.subr.mxu0 0.0
        %378 = vmatpush1.msra.mxu0 0.0
        %379 = vmatprep.subr.mxu0 0.0
        %v380 = vand.u32 %v269, 4294901760
        %v381 = vsub.f32 %v269, %v380
        %v382 = vand.u32 %v381, 4294901760
        %v383 = vsub.f32 %v381, %v382
        %v384 = vand.u32 %v383, 4294901760
        %385 = vmatpush1.msra.mxu0 %v384
        %386 = vmatprep.subr.mxu0 0.0
        %v387 = vand.u32 %v268, 4294901760
        %v388 = vsub.f32 %v268, %v387
        %v389 = vand.u32 %v388, 4294901760
        %v390 = vsub.f32 %v388, %v389
        %v391 = vand.u32 %v390, 4294901760
        %392 = vmatpush1.msra.mxu0 %v391
        %393 = vmatprep.subr.mxu0 0.0
        %394 = vmatpush2.msra.mxu0 0.0
        %395 = vmatprep.subr.mxu0 0.0
        %396 = vmatpush2.msra.mxu0 0.0
        %397 = vmatprep.subr.mxu0 0.0
        %398 = vmatpush2.msra.mxu0 0.0
        %399 = vmatprep.subr.mxu0 0.0
        %400 = vmatpush2.msra.mxu0 0.0
        %401 = vmatprep.subr.mxu0 0.0
        %402 = vmatpush2.msra.mxu0 0.0
        %403 = vmatprep.subr.mxu0 0.0
        %404 = vmatpush2.msra.mxu0 0.0
        %405 = vmatprep.subr.mxu0 0.0
        %406 = vmatpush2.msra.mxu0 0.0
        %407 = vmatprep.subr.mxu0 0.0
        %408 = vmatpush2.msra.mxu0 0.0
        %409 = vmatprep.subr.mxu0 0.0
        %410 = vmatpush2.msra.mxu0 0.0
        %411 = vmatprep.subr.mxu0 0.0
        %412 = vmatpush2.msra.mxu0 0.0
        %413 = vmatprep.subr.mxu0 0.0
        %414 = vmatpush2.msra.mxu0 0.0
        %415 = vmatprep.subr.mxu0 0.0
        %416 = vmatpush2.msra.mxu0 0.0
        %417 = vmatprep.subr.mxu0 0.0
        %418 = vmatpush2.msra.mxu0 0.0
        %419 = vmatprep.subr.mxu0 0.0
        %420 = vmatpush2.msra.mxu0 0.0
        %421 = vmatprep.subr.mxu0 0.0
        %422 = vmatpush2.msra.mxu0 0.0
        %423 = vmatprep.subr.mxu0 0.0
        %424 = vmatpush2.msra.mxu0 0.0
        %425 = vmatprep.mubr.f32.mxu0 0.0
        %v426 = vand.u32 %v272, 4294901760
        %427 = vmatmul.mubr.f32.gmra.mxu0 %v426
        %v428 = vpop.f32.mrf.mxu0
        %v429 = vadd.f32 %v348, %v428
        %v430 = vpop.f32.mrf.mxu0
        %431 = vdwg.mxu0
        %432 = vmatprep.subr.mxu0 0.0
        %433 = vmatpush1.msra.mxu0 0.0
        %434 = vmatprep.subr.mxu0 0.0
        %435 = vmatpush1.msra.mxu0 0.0
        %436 = vmatprep.subr.mxu0 0.0
        %437 = vmatpush1.msra.mxu0 0.0
        %438 = vmatprep.subr.mxu0 0.0
        %439 = vmatpush1.msra.mxu0 0.0
        %440 = vmatprep.subr.mxu0 0.0
        %441 = vmatpush1.msra.mxu0 0.0
        %442 = vmatprep.subr.mxu0 0.0
        %443 = vmatpush1.msra.mxu0 0.0
        %444 = vmatprep.subr.mxu0 0.0
        %445 = vmatpush1.msra.mxu0 0.0
        %446 = vmatprep.subr.mxu0 0.0
        %447 = vmatpush1.msra.mxu0 0.0
        %448 = vmatprep.subr.mxu0 0.0
        %449 = vmatpush1.msra.mxu0 0.0
        %450 = vmatprep.subr.mxu0 0.0
        %451 = vmatpush1.msra.mxu0 0.0
        %452 = vmatprep.subr.mxu0 0.0
        %453 = vmatpush1.msra.mxu0 0.0
        %454 = vmatprep.subr.mxu0 0.0
        %455 = vmatpush1.msra.mxu0 0.0
        %456 = vmatprep.subr.mxu0 0.0
        %457 = vmatpush1.msra.mxu0 0.0
        %458 = vmatprep.subr.mxu0 0.0
        %459 = vmatpush1.msra.mxu0 0.0
        %460 = vmatprep.subr.mxu0 0.0
        %v461 = vand.u32 %v269, 4294901760
        %v462 = vsub.f32 %v269, %v461
        %463 = vmatpush1.msra.mxu0 %v462
        %464 = vmatprep.subr.mxu0 0.0
        %v465 = vand.u32 %v268, 4294901760
        %v466 = vsub.f32 %v268, %v465
        %467 = vmatpush1.msra.mxu0 %v466
        %468 = vmatprep.subr.mxu0 0.0
        %469 = vmatpush2.msra.mxu0 0.0
        %470 = vmatprep.subr.mxu0 0.0
        %471 = vmatpush2.msra.mxu0 0.0
        %472 = vmatprep.subr.mxu0 0.0
        %473 = vmatpush2.msra.mxu0 0.0
        %474 = vmatprep.subr.mxu0 0.0
        %475 = vmatpush2.msra.mxu0 0.0
        %476 = vmatprep.subr.mxu0 0.0
        %477 = vmatpush2.msra.mxu0 0.0
        %478 = vmatprep.subr.mxu0 0.0
        %479 = vmatpush2.msra.mxu0 0.0
        %480 = vmatprep.subr.mxu0 0.0
        %481 = vmatpush2.msra.mxu0 0.0
        %482 = vmatprep.subr.mxu0 0.0
        %483 = vmatpush2.msra.mxu0 0.0
        %484 = vmatprep.subr.mxu0 0.0
        %485 = vmatpush2.msra.mxu0 0.0
        %486 = vmatprep.subr.mxu0 0.0
        %487 = vmatpush2.msra.mxu0 0.0
        %488 = vmatprep.subr.mxu0 0.0
        %489 = vmatpush2.msra.mxu0 0.0
        %490 = vmatprep.subr.mxu0 0.0
        %491 = vmatpush2.msra.mxu0 0.0
        %492 = vmatprep.subr.mxu0 0.0
        %493 = vmatpush2.msra.mxu0 0.0
        %494 = vmatprep.subr.mxu0 0.0
        %495 = vmatpush2.msra.mxu0 0.0
        %496 = vmatprep.subr.mxu0 0.0
        %497 = vmatpush2.msra.mxu0 0.0
        %498 = vmatprep.subr.mxu0 0.0
        %499 = vmatpush2.msra.mxu0 0.0
        %500 = vmatprep.mubr.f32.mxu0 0.0
        %v501 = vand.u32 %v272, 4294901760
        %v502 = vsub.f32 %v272, %v501
        %503 = vmatmul.mubr.f32.gmra.mxu0 %v502
        %v504 = vpop.f32.mrf.mxu0
        %v505 = vadd.f32 %v429, %v504
        %v506 = vpop.f32.mrf.mxu0
        %507 = vdwg.mxu0
        %508 = vmatprep.subr.mxu0 0.0
        %509 = vmatpush1.msra.mxu0 0.0
        %510 = vmatprep.subr.mxu0 0.0
        %511 = vmatpush1.msra.mxu0 0.0
        %512 = vmatprep.subr.mxu0 0.0
        %513 = vmatpush1.msra.mxu0 0.0
        %514 = vmatprep.subr.mxu0 0.0
        %515 = vmatpush1.msra.mxu0 0.0
        %516 = vmatprep.subr.mxu0 0.0
        %517 = vmatpush1.msra.mxu0 0.0
        %518 = vmatprep.subr.mxu0 0.0
        %519 = vmatpush1.msra.mxu0 0.0
        %520 = vmatprep.subr.mxu0 0.0
        %521 = vmatpush1.msra.mxu0 0.0
        %522 = vmatprep.subr.mxu0 0.0
        %523 = vmatpush1.msra.mxu0 0.0
        %524 = vmatprep.subr.mxu0 0.0
        %525 = vmatpush1.msra.mxu0 0.0
        %526 = vmatprep.subr.mxu0 0.0
        %527 = vmatpush1.msra.mxu0 0.0
        %528 = vmatprep.subr.mxu0 0.0
        %529 = vmatpush1.msra.mxu0 0.0
        %530 = vmatprep.subr.mxu0 0.0
        %531 = vmatpush1.msra.mxu0 0.0
        %532 = vmatprep.subr.mxu0 0.0
        %533 = vmatpush1.msra.mxu0 0.0
        %534 = vmatprep.subr.mxu0 0.0
        %535 = vmatpush1.msra.mxu0 0.0
        %536 = vmatprep.subr.mxu0 0.0
        %v537 = vand.u32 %v269, 4294901760
        %538 = vmatpush1.msra.mxu0 %v537
        %539 = vmatprep.subr.mxu0 0.0
        %v540 = vand.u32 %v268, 4294901760
        %541 = vmatpush1.msra.mxu0 %v540
        %542 = vmatprep.subr.mxu0 0.0
        %543 = vmatpush2.msra.mxu0 0.0
        %544 = vmatprep.subr.mxu0 0.0
        %545 = vmatpush2.msra.mxu0 0.0
        %546 = vmatprep.subr.mxu0 0.0
        %547 = vmatpush2.msra.mxu0 0.0
        %548 = vmatprep.subr.mxu0 0.0
        %549 = vmatpush2.msra.mxu0 0.0
        %550 = vmatprep.subr.mxu0 0.0
        %551 = vmatpush2.msra.mxu0 0.0
        %552 = vmatprep.subr.mxu0 0.0
        %553 = vmatpush2.msra.mxu0 0.0
        %554 = vmatprep.subr.mxu0 0.0
        %555 = vmatpush2.msra.mxu0 0.0
        %556 = vmatprep.subr.mxu0 0.0
        %557 = vmatpush2.msra.mxu0 0.0
        %558 = vmatprep.subr.mxu0 0.0
        %559 = vmatpush2.msra.mxu0 0.0
        %560 = vmatprep.subr.mxu0 0.0
        %561 = vmatpush2.msra.mxu0 0.0
        %562 = vmatprep.subr.mxu0 0.0
        %563 = vmatpush2.msra.mxu0 0.0
        %564 = vmatprep.subr.mxu0 0.0
        %565 = vmatpush2.msra.mxu0 0.0
        %566 = vmatprep.subr.mxu0 0.0
        %567 = vmatpush2.msra.mxu0 0.0
        %568 = vmatprep.subr.mxu0 0.0
        %569 = vmatpush2.msra.mxu0 0.0
        %570 = vmatprep.subr.mxu0 0.0
        %571 = vmatpush2.msra.mxu0 0.0
        %572 = vmatprep.subr.mxu0 0.0
        %573 = vmatpush2.msra.mxu0 0.0
        %574 = vmatprep.mubr.f32.mxu0 0.0
        %v575 = vand.u32 %v272, 4294901760
        %v576 = vsub.f32 %v272, %v575
        %v577 = vand.u32 %v576, 4294901760
        %578 = vmatmul.mubr.f32.gmra.mxu0 %v577
        %v579 = vpop.f32.mrf.mxu0
        %v580 = vadd.f32 %v505, %v579
        %v581 = vpop.f32.mrf.mxu0
        %582 = vdwg.mxu0
        %583 = vmatprep.subr.mxu0 0.0
        %584 = vmatpush1.msra.mxu0 0.0
        %585 = vmatprep.subr.mxu0 0.0
        %586 = vmatpush1.msra.mxu0 0.0
        %587 = vmatprep.subr.mxu0 0.0
        %588 = vmatpush1.msra.mxu0 0.0
        %589 = vmatprep.subr.mxu0 0.0
        %590 = vmatpush1.msra.mxu0 0.0
        %591 = vmatprep.subr.mxu0 0.0
        %592 = vmatpush1.msra.mxu0 0.0
        %593 = vmatprep.subr.mxu0 0.0
        %594 = vmatpush1.msra.mxu0 0.0
        %595 = vmatprep.subr.mxu0 0.0
        %596 = vmatpush1.msra.mxu0 0.0
        %597 = vmatprep.subr.mxu0 0.0
        %598 = vmatpush1.msra.mxu0 0.0
        %599 = vmatprep.subr.mxu0 0.0
        %600 = vmatpush1.msra.mxu0 0.0
        %601 = vmatprep.subr.mxu0 0.0
        %602 = vmatpush1.msra.mxu0 0.0
        %603 = vmatprep.subr.mxu0 0.0
        %604 = vmatpush1.msra.mxu0 0.0
        %605 = vmatprep.subr.mxu0 0.0
        %606 = vmatpush1.msra.mxu0 0.0
        %607 = vmatprep.subr.mxu0 0.0
        %608 = vmatpush1.msra.mxu0 0.0
        %609 = vmatprep.subr.mxu0 0.0
        %610 = vmatpush1.msra.mxu0 0.0
        %611 = vmatprep.subr.mxu0 0.0
        %v612 = vand.u32 %v269, 4294901760
        %v613 = vsub.f32 %v269, %v612
        %v614 = vand.u32 %v613, 4294901760
        %615 = vmatpush1.msra.mxu0 %v614
        %616 = vmatprep.subr.mxu0 0.0
        %v617 = vand.u32 %v268, 4294901760
        %v618 = vsub.f32 %v268, %v617
        %v619 = vand.u32 %v618, 4294901760
        %620 = vmatpush1.msra.mxu0 %v619
        %621 = vmatprep.subr.mxu0 0.0
        %622 = vmatpush2.msra.mxu0 0.0
        %623 = vmatprep.subr.mxu0 0.0
        %624 = vmatpush2.msra.mxu0 0.0
        %625 = vmatprep.subr.mxu0 0.0
        %626 = vmatpush2.msra.mxu0 0.0
        %627 = vmatprep.subr.mxu0 0.0
        %628 = vmatpush2.msra.mxu0 0.0
        %629 = vmatprep.subr.mxu0 0.0
        %630 = vmatpush2.msra.mxu0 0.0
        %631 = vmatprep.subr.mxu0 0.0
        %632 = vmatpush2.msra.mxu0 0.0
        %633 = vmatprep.subr.mxu0 0.0
        %634 = vmatpush2.msra.mxu0 0.0
        %635 = vmatprep.subr.mxu0 0.0
        %636 = vmatpush2.msra.mxu0 0.0
        %637 = vmatprep.subr.mxu0 0.0
        %638 = vmatpush2.msra.mxu0 0.0
        %639 = vmatprep.subr.mxu0 0.0
        %640 = vmatpush2.msra.mxu0 0.0
        %641 = vmatprep.subr.mxu0 0.0
        %642 = vmatpush2.msra.mxu0 0.0
        %643 = vmatprep.subr.mxu0 0.0
        %644 = vmatpush2.msra.mxu0 0.0
        %645 = vmatprep.subr.mxu0 0.0
        %646 = vmatpush2.msra.mxu0 0.0
        %647 = vmatprep.subr.mxu0 0.0
        %648 = vmatpush2.msra.mxu0 0.0
        %649 = vmatprep.subr.mxu0 0.0
        %650 = vmatpush2.msra.mxu0 0.0
        %651 = vmatprep.subr.mxu0 0.0
        %652 = vmatpush2.msra.mxu0 0.0
        %653 = vmatprep.mubr.f32.mxu0 0.0
        %v654 = vand.u32 %v272, 4294901760
        %655 = vmatmul.mubr.f32.gmra.mxu0 %v654
        %v656 = vpop.f32.mrf.mxu0
        %v657 = vadd.f32 %v580, %v656
        %v658 = vpop.f32.mrf.mxu0
        %659 = vdwg.mxu0
        %660 = vmatprep.subr.mxu0 0.0
        %661 = vmatpush1.msra.mxu0 0.0
        %662 = vmatprep.subr.mxu0 0.0
        %663 = vmatpush1.msra.mxu0 0.0
        %664 = vmatprep.subr.mxu0 0.0
        %665 = vmatpush1.msra.mxu0 0.0
        %666 = vmatprep.subr.mxu0 0.0
        %667 = vmatpush1.msra.mxu0 0.0
        %668 = vmatprep.subr.mxu0 0.0
        %669 = vmatpush1.msra.mxu0 0.0
        %670 = vmatprep.subr.mxu0 0.0
        %671 = vmatpush1.msra.mxu0 0.0
        %672 = vmatprep.subr.mxu0 0.0
        %673 = vmatpush1.msra.mxu0 0.0
        %674 = vmatprep.subr.mxu0 0.0
        %675 = vmatpush1.msra.mxu0 0.0
        %676 = vmatprep.subr.mxu0 0.0
        %677 = vmatpush1.msra.mxu0 0.0
        %678 = vmatprep.subr.mxu0 0.0
        %679 = vmatpush1.msra.mxu0 0.0
        %680 = vmatprep.subr.mxu0 0.0
        %681 = vmatpush1.msra.mxu0 0.0
        %682 = vmatprep.subr.mxu0 0.0
        %683 = vmatpush1.msra.mxu0 0.0
        %684 = vmatprep.subr.mxu0 0.0
        %685 = vmatpush1.msra.mxu0 0.0
        %686 = vmatprep.subr.mxu0 0.0
        %687 = vmatpush1.msra.mxu0 0.0
        %688 = vmatprep.subr.mxu0 0.0
        %v689 = vand.u32 %v269, 4294901760
        %690 = vmatpush1.msra.mxu0 %v689
        %691 = vmatprep.subr.mxu0 0.0
        %v692 = vand.u32 %v268, 4294901760
        %693 = vmatpush1.msra.mxu0 %v692
        %694 = vmatprep.subr.mxu0 0.0
        %695 = vmatpush2.msra.mxu0 0.0
        %696 = vmatprep.subr.mxu0 0.0
        %697 = vmatpush2.msra.mxu0 0.0
        %698 = vmatprep.subr.mxu0 0.0
        %699 = vmatpush2.msra.mxu0 0.0
        %700 = vmatprep.subr.mxu0 0.0
        %701 = vmatpush2.msra.mxu0 0.0
        %702 = vmatprep.subr.mxu0 0.0
        %703 = vmatpush2.msra.mxu0 0.0
        %704 = vmatprep.subr.mxu0 0.0
        %705 = vmatpush2.msra.mxu0 0.0
        %706 = vmatprep.subr.mxu0 0.0
        %707 = vmatpush2.msra.mxu0 0.0
        %708 = vmatprep.subr.mxu0 0.0
        %709 = vmatpush2.msra.mxu0 0.0
        %710 = vmatprep.subr.mxu0 0.0
        %711 = vmatpush2.msra.mxu0 0.0
        %712 = vmatprep.subr.mxu0 0.0
        %713 = vmatpush2.msra.mxu0 0.0
        %714 = vmatprep.subr.mxu0 0.0
        %715 = vmatpush2.msra.mxu0 0.0
        %716 = vmatprep.subr.mxu0 0.0
        %717 = vmatpush2.msra.mxu0 0.0
        %718 = vmatprep.subr.mxu0 0.0
        %719 = vmatpush2.msra.mxu0 0.0
        %720 = vmatprep.subr.mxu0 0.0
        %721 = vmatpush2.msra.mxu0 0.0
        %722 = vmatprep.subr.mxu0 0.0
        %723 = vmatpush2.msra.mxu0 0.0
        %724 = vmatprep.subr.mxu0 0.0
        %725 = vmatpush2.msra.mxu0 0.0
        %726 = vmatprep.mubr.f32.mxu0 0.0
        %v727 = vand.u32 %v272, 4294901760
        %728 = vmatmul.mubr.f32.gmra.mxu0 %v727
        %v729 = vpop.f32.mrf.mxu0
        %v730 = vadd.f32 %v657, %v729
        %v731 = vpop.f32.mrf.mxu0
        %732 = vdwg.mxu0
        %733 = vst.msk [vmem:[%s252] sm:$0xff] %vm270, %v730
        %735 = vrot.lane.b32.xlu0 %v730, 96
        %v736 = vpop.permute.xlu0 %735
        %738 = vst.msk [vmem:[%s259] sm:$0xff] %vm270, %v736
        %739 = vrot.lane.b32.xlu0 %v730, 64
        %v740 = vpop.permute.xlu0 %739
        %742 = vst.msk [vmem:[%s266] sm:$0xff] %vm270, %v740
        %743 = vrot.lane.b32.xlu0 %v730, 112
        %v744 = vpop.permute.xlu0 %743
        %s746 = scalar_lea.vmem %s252, 8 [#allocation7]
        %747 = vst.msk [vmem:[%s746] sm:$0xff] %vm270, %v744
        %748 = vrot.lane.b32.xlu0 %v730, 80
        %v749 = vpop.permute.xlu0 %748
        %s751 = scalar_lea.vmem %s259, 8 [#allocation8]
        %752 = vst.msk [vmem:[%s751] sm:$0xff] %vm270, %v749
        %753 = vrot.lane.b32.xlu0 %v730, 48
        %v754 = vpop.permute.xlu0 %753
        %s756 = scalar_lea.vmem %s266, 8 [#allocation10]
        %757 = vst.msk [vmem:[%s756] sm:$0xff] %vm270, %v754
        %s758 = sand.u32 %s97, 1
        %s759 = scalar_lea.sflag [#allocation4], %s758
        %s760 = sand.u32 %s97, 1
        %s761 = smul.addr %s760, 16
        %s762 = scalar_lea.vmem [#allocation7], %s761
        %s763 = sand.u32 %s26, 1
        %s764 = scalar_lea.sflag [#allocation9], %s763
        %s765 = sand.u32 %s125, 1
        %s766 = smul.addr %s765, 16
        %s767 = scalar_lea.vmem [#allocation8], %s766
        %s768 = sand.u32 %s26, 1
        %s769 = scalar_lea.sflag [#allocation9], %s768
        %s770 = sand.u32 %s153, 1
        %s771 = smul.addr %s770, 16
        %s772 = scalar_lea.vmem [#allocation10], %s771
        // Predicated region
        $region37: #{tpu_custom_call.1} parent=27 // pred_check
          %p773 = pneg %p107
        $region38: #{tpu_custom_call.1} parent=27 // pred_check_branch
          %775 = sbr.rel (%p773) target = $region40
        $region39: #{tpu_custom_call.1} parent=27 // pred_region
          %s777 = ssub.s32 256, 256
          %778 = vsyncadd %s759, %s777
          %s779 = smul.addr %s30, 2
          %s780 = sadd.s32 %s31, %s779
          %s781 = smul.addr %s780, 128
          %s782 = scalar_lea.hbm %s2, %s781
          %s783 = sshll.u32 %s762, 4
          %s784 = int_to_ptr.vmem [resolvable:$true] %s783
          %789 = dma.vmem_to_hbm [thread:$0]  %s784, 256, %s782, %s759, 128, 128, 8
        $region40: #{tpu_custom_call.1} parent=27 // pred_fallthru
          _
        // Predicated region
        $region41: #{tpu_custom_call.1} parent=27 // pred_check
          %p790 = pneg %p135
        $region42: #{tpu_custom_call.1} parent=27 // pred_check_branch
          %792 = sbr.rel (%p790) target = $region44
        $region43: #{tpu_custom_call.1} parent=27 // pred_region
          %s794 = ssub.s32 256, 256
          %795 = vsyncadd %s764, %s794
          %s796 = smul.addr %s30, 2
          %s797 = sadd.s32 %s31, %s796
          %s798 = smul.addr %s797, 128
          %s799 = scalar_lea.hbm %s3, %s798
          %s800 = sshll.u32 %s767, 4
          %s801 = int_to_ptr.vmem [resolvable:$true] %s800
          %806 = dma.vmem_to_hbm [thread:$0]  %s801, 256, %s799, %s764, 128, 128, 8
        $region44: #{tpu_custom_call.1} parent=27 // pred_fallthru
          _
        // Predicated region
        $region45: #{tpu_custom_call.1} parent=27 // pred_check
          %p807 = pneg %p163
        $region46: #{tpu_custom_call.1} parent=27 // pred_check_branch
          %809 = sbr.rel (%p807) target = $region48
        $region47: #{tpu_custom_call.1} parent=27 // pred_region
          %s811 = ssub.s32 256, 256
          %812 = vsyncadd %s769, %s811
          %s813 = smul.addr %s30, 2
          %s814 = sadd.s32 %s31, %s813
          %s815 = smul.addr %s814, 128
          %s816 = scalar_lea.hbm %s4, %s815
          %s817 = sshll.u32 %s772, 4
          %s818 = int_to_ptr.vmem [resolvable:$true] %s817
          %823 = dma.vmem_to_hbm [thread:$0]  %s818, 256, %s816, %s769, 128, 128, 8
        $region48: #{tpu_custom_call.1} parent=27 // pred_fallthru
          _
      $region28: #{tpu_custom_call.1} parent=5 // pred_fallthru
        _
      %p824 = scmp.le.s32.totalorder 2, %s21
      // Predicated region
      $region49: #{tpu_custom_call.1} parent=5 // pred_check
        %p825 = pneg %p824
      $region50: #{tpu_custom_call.1} parent=5 // pred_check_branch
        %827 = sbr.rel (%p825) target = $region52
      $region51: #{tpu_custom_call.1} parent=5 // pred_region
        %s828 = ssub.s32 %s21, 2
        // Predicated region
        $region53: #{tpu_custom_call.1} parent=51 // pred_check
          %p829 = pneg %p113
        $region54: #{tpu_custom_call.1} parent=51 // pred_check_branch
          %831 = sbr.rel (%p829) target = $region56
        $region55: #{tpu_custom_call.1} parent=51 // pred_region
          %s832 = sand.u32 %s98, 1
          %s833 = scalar_lea.sflag [#allocation4], %s832
          %s834 = sand.u32 %s98, 1
          %s835 = smul.addr %s834, 16
          %s836 = scalar_lea.vmem [#allocation7], %s835
          %837 = dma.done %s833, 256
        $region56: #{tpu_custom_call.1} parent=51 // pred_fallthru
          _
        // Predicated region
        $region57: #{tpu_custom_call.1} parent=51 // pred_check
          %p838 = pneg %p141
        $region58: #{tpu_custom_call.1} parent=51 // pred_check_branch
          %840 = sbr.rel (%p838) target = $region60
        $region59: #{tpu_custom_call.1} parent=51 // pred_region
          %s841 = sand.u32 %s27, 1
          %s842 = scalar_lea.sflag [#allocation9], %s841
          %s843 = sand.u32 %s126, 1
          %s844 = smul.addr %s843, 16
          %s845 = scalar_lea.vmem [#allocation8], %s844
          %846 = dma.done %s842, 256
        $region60: #{tpu_custom_call.1} parent=51 // pred_fallthru
          _
        // Predicated region
        $region61: #{tpu_custom_call.1} parent=51 // pred_check
          %p847 = pneg %p169
        $region62: #{tpu_custom_call.1} parent=51 // pred_check_branch
          %849 = sbr.rel (%p847) target = $region64
        $region63: #{tpu_custom_call.1} parent=51 // pred_region
          %s850 = sand.u32 %s27, 1
          %s851 = scalar_lea.sflag [#allocation9], %s850
          %s852 = sand.u32 %s154, 1
          %s853 = smul.addr %s852, 16
          %s854 = scalar_lea.vmem [#allocation10], %s853
          %855 = dma.done %s851, 256
        $region64: #{tpu_custom_call.1} parent=51 // pred_fallthru
          _
      $region52: #{tpu_custom_call.1} parent=5 // pred_fallthru
        _
    $region6: #{tpu_custom_call.1} parent=1 // loop_footer
      %s25 = sadd.s32 1, %s21
    $region7: #{tpu_custom_call.1} parent=1 // loop_footer_branch
      %20 = sbr.rel target = $region3
    $region8: #{tpu_custom_call.1} parent=1 // loop_exit
      _
    %856 = vsyncpa [#allocation3], 1
    %s857 = scalar_lea.sflag [#allocation3], 1
    %858 = vsyncpa %s857, 1
    %859 = vsyncpa [#allocation6], 1
    %860 = vsyncpa [#allocation4], 1
    %s861 = scalar_lea.sflag [#allocation4], 1
    %862 = vsyncpa %s861, 1
    %863 = vsyncpa [#allocation9], 1
    %s864 = scalar_lea.sflag [#allocation9], 1
    %865 = vsyncpa %s864, 1

</llo_original>
